<compile_context>
chip_gen: v7x
topology: tpu7x:2x2x1
jax: 0.10.0
libtpu: 0.0.40
codegen_flags: <defaults>
</compile_context>

<pallas_src>
import jax
import jax.numpy as jnp
from jax.experimental import pallas as pl
from jax.experimental.pallas import tpu as pltpu


# --------------------------------------------------------------------------- #
# Weight construction (PyTorch align_corners=False, half-pixel centers)
# --------------------------------------------------------------------------- #
def _interp_weight_matrix(in_size: int, out_size: int) -> jnp.ndarray:
    """Row-stochastic (out_size, in_size) 1-D linear-interp matrix."""
    scale = in_size / out_size
    o = jnp.arange(out_size, dtype=jnp.float32)
    src = (o + 0.5) * scale - 0.5
    src = jnp.maximum(src, 0.0)                                   # PyTorch clamps negatives
    i0 = jnp.minimum(jnp.floor(src).astype(jnp.int32), in_size - 1)
    i1 = jnp.minimum(i0 + 1, in_size - 1)
    lam1 = src - i0.astype(jnp.float32)
    lam0 = 1.0 - lam1
    cols = jnp.arange(in_size, dtype=jnp.int32)[None, :]
    w = (lam0[:, None] * (cols == i0[:, None]).astype(jnp.float32)
         + lam1[:, None] * (cols == i1[:, None]).astype(jnp.float32))
    return w  # (out_size, in_size), float32


# --------------------------------------------------------------------------- #
# Generation-aware sizing helpers (review: derive from get_tpu_info, not 24/32M)
# --------------------------------------------------------------------------- #
def _vmem_budget_and_limit():
    cap = 64 * 1024 * 1024          # conservative fallback (v7x per-TC VMEM)
    try:
        info = pltpu.get_tpu_info()
        v = getattr(info, "vmem_capacity_bytes", None)
        if v:
            cap = int(v)
    except Exception:
        pass
    # ~40% of capacity as the block-sizing budget, ~50% as the compiler limit.
    # v5e/v6e (128 MiB): 51 / 64 MiB.  v7x (64 MiB): 25.6 / 32 MiB (< 48 MiB cap).
    return int(0.40 * cap), int(0.50 * cap)


def _num_tensorcores() -> int:
    """Best-effort TensorCore count (2 on v7x, 1 on v5e/v6e)."""
    try:
        v = getattr(pltpu.get_tpu_info(), "num_cores", None)
        if isinstance(v, int) and v > 0:
            return v
    except Exception:
        pass
    try:
        v = getattr(jax.devices()[0], "num_cores", None)
        if isinstance(v, int) and v > 0:
            return v
    except Exception:
        pass
    return 1


def _pick_cb(C, H_in, W_in, H_out, W_out, in_bytes, out_bytes, w_bytes,
             budget, n_cores=1, unroll_cap=32):
    """Largest channel batch that keeps the output block lane-dense and fits VMEM.

    Weights are counted 1x (single-buffered, constant index_map); there is no
    cb^2 block-diagonal term anymore.  max(fitting) naturally maximizes the
    cb*W_out lane width (>=256 when C allows, which also helps v6e/v7x MXU fill).
    """
    def vmem(cb):
        return (2 * cb * H_in * W_in * in_bytes             # x block, double-buffered
                + 2 * H_out * cb * W_out * out_bytes        # out block, double-buffered
                + (H_out * H_in + W_in * W_out) * w_bytes   # weights, single-buffered
                + 4 * cb * W_out * (H_in + H_out))          # f32 intermediates

    # Input block is 3-D with full-extent (H_in, W_in) -> always legal.  Only
    # the lane-dense output slab constrains cb: cb*W_out % 128 == 0, or cb == C.
    legal = [cb for cb in range(1, min(C, unroll_cap) + 1)
             if C % cb == 0 and (cb == C or (cb * W_out) % 128 == 0)]
    if not legal:
        legal = [C]                       # full channel fold is always legal
    fitting = [cb for cb in legal if vmem(cb) <= budget] or [min(legal)]
    cb = max(fitting)

    # v7x: prefer a grid of >= n_cores "parallel" steps so both TensorCores are
    # busy, but only when per-step traffic dwarfs the ~0.35us/step overhead.
    if n_cores >= 2 and C // cb < n_cores:
        def per_step_bytes(c):
            return c * (H_in * W_in * in_bytes + H_out * W_out * out_bytes)
        cands = [c for c in fitting
                 if C // c >= n_cores and per_step_bytes(c) >= 256 * 1024]
        if cands:
            cb = max(cands)
    return cb


# --------------------------------------------------------------------------- #
# Kernel
# --------------------------------------------------------------------------- #
def _interp_kernel(x_ref, wwt_ref, wh_ref, o_ref):
    # x_ref  : (cb, H_in, W_in)    native NCHW channel slice (no wrapper fold)
    # wwt_ref: (W_in, W_out)       shared width weights (resident)
    # wh_ref : (H_out, H_in)       shared height weights (resident)
    # o_ref  : (H_out, cb*W_out)   lane-dense output slab for this channel batch
    cb, h_in, w_in = x_ref.shape
    w_out = wwt_ref.shape[1]
    cdt = wwt_ref.dtype                              # MXU operand dtype (f32 or bf16)
    wwt = wwt_ref[...]
    wh = wh_ref[...]

    if h_in % 8 == 0:
        # Sublane-aligned: merge the channel batch into M and run the width
        # pass as one matmul (leading-dim merge is a layout-trivial reshape).
        xw = jnp.dot(x_ref[...].reshape(cb * h_in, w_in).astype(cdt), wwt,
                     preferred_element_type=jnp.float32)          # (cb*H_in, W_out)
        t_blocks = [xw[c * h_in:(c + 1) * h_in, :] for c in range(cb)]
    else:
        # Unaligned H_in: keep everything per-channel (no reshapes needed).
        t_blocks = [jnp.dot(x_ref[c].astype(cdt), wwt,
                            preferred_element_type=jnp.float32)
                    for c in range(cb)]

    # Height pass per channel, writing its column block of the lane-dense slab.
    # cb is a small static Python int -> fully unrolled; the HBM writeback of
    # o_ref stays a single unmasked (H_out, cb*W_out) DMA.
    for c in range(cb):
        out_c = jnp.dot(wh, t_blocks[c].astype(cdt),
                        preferred_element_type=jnp.float32)       # (H_out, W_out)
        o_ref[:, c * w_out:(c + 1) * w_out] = out_c.astype(o_ref.dtype)


# --------------------------------------------------------------------------- #
# Wrapper
# --------------------------------------------------------------------------- #
def interpolate_bilinear(x: jnp.ndarray, size, cb=None, use_bf16_mxu=False) -> jnp.ndarray:
    """x: (C, H_in, W_in) -> (1, C, H_out, W_out), bilinear, align_corners=False."""
    C, H_in, W_in = x.shape
    H_out, W_out = size

    # bf16 MXU path is opt-in (costs ~1e-3 rel. error vs PyTorch f32 bilinear).
    compute_dtype = (jnp.bfloat16
                     if (x.dtype == jnp.bfloat16 or use_bf16_mxu) else jnp.float32)
    in_bytes = jnp.dtype(x.dtype).itemsize
    w_bytes = jnp.dtype(compute_dtype).itemsize

    budget, vmem_limit = _vmem_budget_and_limit()
    n_cores = _num_tensorcores()
    if cb is None:
        cb = _pick_cb(C, H_in, W_in, H_out, W_out, in_bytes, in_bytes, w_bytes,
                      budget=budget, n_cores=n_cores)
    assert C % cb == 0 and (cb == C or (cb * W_out) % 128 == 0), (C, cb, W_out)

    wh = _interp_weight_matrix(H_in, H_out).astype(compute_dtype)     # (H_out, H_in)
    wwt = _interp_weight_matrix(W_in, W_out).T.astype(compute_dtype)  # (W_in, W_out)

    grid = (C // cb,)
    # Dense MACs actually executed (width pass + height pass) and real HBM bytes.
    flops = 2 * C * H_in * W_out * (W_in + H_out)
    bytes_accessed = (C * H_in * W_in * in_bytes
                      + C * H_out * W_out * in_bytes
                      + (wh.size + wwt.size) * w_bytes)

    def run(single_buffer_weights: bool):
        if single_buffer_weights:
            # Constant index_map -> weights never change; single-buffer them.
            w_specs = [
                pl.BlockSpec((W_in, W_out), lambda g: (0, 0),
                             pipeline_mode=pl.Buffered(1)),
                pl.BlockSpec((H_out, H_in), lambda g: (0, 0),
                             pipeline_mode=pl.Buffered(1)),
            ]
        else:
            w_specs = [
                pl.BlockSpec((W_in, W_out), lambda g: (0, 0)),
                pl.BlockSpec((H_out, H_in), lambda g: (0, 0)),
            ]
        return pl.pallas_call(
            _interp_kernel,
            out_shape=jax.ShapeDtypeStruct((H_out, C * W_out), x.dtype),
            grid_spec=pltpu.PrefetchScalarGridSpec(
                num_scalar_prefetch=0,
                grid=grid,
                in_specs=[pl.BlockSpec((cb, H_in, W_in), lambda g: (g, 0, 0))]
                         + w_specs,
                out_specs=pl.BlockSpec((H_out, cb * W_out), lambda g: (0, g)),
            ),
            compiler_params=pltpu.CompilerParams(
                dimension_semantics=("parallel",),
                vmem_limit_bytes=vmem_limit,
            ),
            cost_estimate=pl.CostEstimate(
                flops=int(flops), transcendentals=0,
                bytes_accessed=int(bytes_accessed)),
        )(x, wwt, wh)

    try:
        out_f = run(True)
    except Exception:
        # pipeline_mode=pl.Buffered(1) unavailable in this build; weights are
        # only a few KiB so double-buffering them costs nothing meaningful.
        out_f = run(False)

    # Unfold channels: (H_out, C*W_out) -> (C, H_out, W_out); unsqueeze(0) as in PyTorch.
    out = jnp.transpose(out_f.reshape(H_out, C, W_out), (1, 0, 2))
    return out[None, ...]


class Interpolate:
    """Pallas-backed stand-in for the PyTorch Interpolate module."""

    def __init__(self, size, mode):
        assert mode == "bilinear", "TODO(synk): only mode='bilinear' implemented"
        self.size = size
        self.mode = mode

    def __call__(self, x, cb=None):
        return interpolate_bilinear(x, self.size, cb=cb)


def _reference(x, size):
    """Plain-JAX (XLA) reference using independently applied weight matrices."""
    H_in, W_in = x.shape[-2:]
    H_out, W_out = size
    wh = _interp_weight_matrix(H_in, H_out)
    ww = _interp_weight_matrix(W_in, W_out)
    out = jnp.einsum('oh,chw,pw->cop', wh, x.astype(jnp.float32), ww)
    return out[None, ...].astype(x.dtype)


if __name__ == "__main__":
    key = jax.random.PRNGKey(0)
    size = (32, 32)                         # Interpolate(size=(32, 32), mode='bilinear')
    module = Interpolate(size, "bilinear")

    # Case 1: module-sized input, auto channel batch (grid=(1,), 128-lane output).
    C, H, W = 4, 16, 16
    x = jax.random.normal(key, (C, H, W), dtype=jnp.float32)
    y = jax.block_until_ready(module(x))
    assert y.shape == (1, C, size[0], size[1]), y.shape
    assert jnp.allclose(y, _reference(x, size), atol=1e-5, rtol=1e-5)

    # Case 2: more channels with a forced smaller channel batch, exercising a
    # multi-step grid (grid=(2,)) and the per-batch channel fold of the output.
    C2 = 16
    x2 = jax.random.normal(jax.random.PRNGKey(1), (C2, H, W), dtype=jnp.float32)
    y2 = jax.block_until_ready(module(x2, cb=8))
    assert y2.shape == (1, C2, size[0], size[1]), y2.shape
    assert jnp.allclose(y2, _reference(x2, size), atol=1e-5, rtol=1e-5)

    print("KERNEL_OK")
</pallas_src>

<mosaic_0001>
module attributes {stable_mosaic.version = 11 : i64} {
  func.func @_interp_kernel(%arg0: i32, %arg1: memref<4x16x16xf32, #tpu.memory_space<vmem>>, %arg2: memref<16x32xf32, #tpu.memory_space<vmem>>, %arg3: memref<32x16xf32, #tpu.memory_space<vmem>>, %arg4: memref<32x128xf32, #tpu.memory_space<vmem>>) attributes {dimension_semantics = [#tpu.dimension_semantics<parallel>], iteration_bounds = array<i64: 1>, scalar_prefetch = 0 : i64, scratch_operands = 0 : i64, tpu.core_type = #tpu.core_type<tc>, window_params = [{transform_indices = @transform_0, window_bounds = array<i64: 4, 16, 16>}, {pipeline_mode = #tpu.pipeline_mode<synchronous>, transform_indices = @transform_1, window_bounds = array<i64: 16, 32>}, {pipeline_mode = #tpu.pipeline_mode<synchronous>, transform_indices = @transform_2, window_bounds = array<i64: 32, 16>}, {transform_indices = @transform_3, window_bounds = array<i64: 32, 128>}]} {
    %c0 = arith.constant 0 : index
    %c0_0 = arith.constant 0 : index
    %0 = vector.load %arg2[%c0, %c0_0] : memref<16x32xf32, #tpu.memory_space<vmem>>, vector<16x32xf32>
    %c0_1 = arith.constant 0 : index
    %c0_2 = arith.constant 0 : index
    %1 = vector.load %arg3[%c0_1, %c0_2] : memref<32x16xf32, #tpu.memory_space<vmem>>, vector<32x16xf32>
    %c0_3 = arith.constant 0 : index
    %c0_4 = arith.constant 0 : index
    %c0_5 = arith.constant 0 : index
    %2 = vector.load %arg1[%c0_3, %c0_4, %c0_5] : memref<4x16x16xf32, #tpu.memory_space<vmem>>, vector<4x16x16xf32>
    %3 = vector.shape_cast %2 : vector<4x16x16xf32> to vector<64x16xf32>
    %cst = arith.constant dense<0.000000e+00> : vector<64x32xf32>
    %4 = tpu.matmul %3, %0, %cst {dimension_numbers = #tpu.dot_dimension_numbers<[1], [0], [0], [1], [0, 0, 1, 1], [], []>} : vector<64x16xf32>, vector<16x32xf32>, vector<64x32xf32> -> vector<64x32xf32>
    %5 = vector.extract_strided_slice %4 {offsets = [0, 0], sizes = [16, 32], strides = [1, 1]} : vector<64x32xf32> to vector<16x32xf32>
    %6 = vector.extract_strided_slice %4 {offsets = [16, 0], sizes = [16, 32], strides = [1, 1]} : vector<64x32xf32> to vector<16x32xf32>
    %7 = vector.extract_strided_slice %4 {offsets = [32, 0], sizes = [16, 32], strides = [1, 1]} : vector<64x32xf32> to vector<16x32xf32>
    %8 = vector.extract_strided_slice %4 {offsets = [48, 0], sizes = [16, 32], strides = [1, 1]} : vector<64x32xf32> to vector<16x32xf32>
    %cst_6 = arith.constant dense<0.000000e+00> : vector<32x32xf32>
    %9 = tpu.matmul %1, %5, %cst_6 {dimension_numbers = #tpu.dot_dimension_numbers<[1], [0], [0], [1], [0, 0, 1, 1], [], []>} : vector<32x16xf32>, vector<16x32xf32>, vector<32x32xf32> -> vector<32x32xf32>
    %c0_7 = arith.constant 0 : index
    %c0_8 = arith.constant 0 : index
    %10 = vector.load %arg4[%c0_7, %c0_8] : memref<32x128xf32, #tpu.memory_space<vmem>>, vector<32x32xf32>
    tpu.vector_store %arg4[%c0_7, %c0_8], %9 {strides = array<i32>} : memref<32x128xf32, #tpu.memory_space<vmem>>, vector<32x32xf32>,
    %cst_9 = arith.constant dense<0.000000e+00> : vector<32x32xf32>
    %11 = tpu.matmul %1, %6, %cst_9 {dimension_numbers = #tpu.dot_dimension_numbers<[1], [0], [0], [1], [0, 0, 1, 1], [], []>} : vector<32x16xf32>, vector<16x32xf32>, vector<32x32xf32> -> vector<32x32xf32>
    %c0_10 = arith.constant 0 : index
    %c32 = arith.constant 32 : index
    %12 = vector.load %arg4[%c0_10, %c32] : memref<32x128xf32, #tpu.memory_space<vmem>>, vector<32x32xf32>
    tpu.vector_store %arg4[%c0_10, %c32], %11 {strides = array<i32>} : memref<32x128xf32, #tpu.memory_space<vmem>>, vector<32x32xf32>,
    %cst_11 = arith.constant dense<0.000000e+00> : vector<32x32xf32>
    %13 = tpu.matmul %1, %7, %cst_11 {dimension_numbers = #tpu.dot_dimension_numbers<[1], [0], [0], [1], [0, 0, 1, 1], [], []>} : vector<32x16xf32>, vector<16x32xf32>, vector<32x32xf32> -> vector<32x32xf32>
    %c0_12 = arith.constant 0 : index
    %c64 = arith.constant 64 : index
    %14 = vector.load %arg4[%c0_12, %c64] : memref<32x128xf32, #tpu.memory_space<vmem>>, vector<32x32xf32>
    tpu.vector_store %arg4[%c0_12, %c64], %13 {strides = array<i32>} : memref<32x128xf32, #tpu.memory_space<vmem>>, vector<32x32xf32>,
    %cst_13 = arith.constant dense<0.000000e+00> : vector<32x32xf32>
    %15 = tpu.matmul %1, %8, %cst_13 {dimension_numbers = #tpu.dot_dimension_numbers<[1], [0], [0], [1], [0, 0, 1, 1], [], []>} : vector<32x16xf32>, vector<16x32xf32>, vector<32x32xf32> -> vector<32x32xf32>
    %c0_14 = arith.constant 0 : index
    %c96 = arith.constant 96 : index
    %16 = vector.load %arg4[%c0_14, %c96] : memref<32x128xf32, #tpu.memory_space<vmem>>, vector<32x32xf32>
    tpu.vector_store %arg4[%c0_14, %c96], %15 {strides = array<i32>} : memref<32x128xf32, #tpu.memory_space<vmem>>, vector<32x32xf32>,
    return
  }
  func.func @transform_0(%arg0: i32) -> (i32, i32, i32) {
    %c0_i32 = arith.constant 0 : i32
    %c0_i32_0 = arith.constant 0 : i32
    %c0_i32_1 = arith.constant 0 : i32
    return %arg0, %c0_i32, %c0_i32_0 : i32, i32, i32
  }
  func.func @transform_1(%arg0: i32) -> (i32, i32) {
    %c0_i32 = arith.constant 0 : i32
    %c0_i32_0 = arith.constant 0 : i32
    %c0_i32_1 = arith.constant 0 : i32
    return %c0_i32, %c0_i32_0 : i32, i32
  }
  func.func @transform_2(%arg0: i32) -> (i32, i32) {
    %c0_i32 = arith.constant 0 : i32
    %c0_i32_0 = arith.constant 0 : i32
    %c0_i32_1 = arith.constant 0 : i32
    return %c0_i32, %c0_i32_0 : i32, i32
  }
  func.func @transform_3(%arg0: i32) -> (i32, i32) {
    %c0_i32 = arith.constant 0 : i32
    %c0_i32_0 = arith.constant 0 : i32
    return %c0_i32, %arg0 : i32, i32
  }
}

module attributes {stable_mosaic.version = 11 : i64} {
  func.func @_interp_kernel(%arg0: i32, %arg1: memref<4x16x16xf32, #tpu.memory_space<vmem>>, %arg2: memref<16x32xf32, #tpu.memory_space<vmem>>, %arg3: memref<32x16xf32, #tpu.memory_space<vmem>>, %arg4: memref<32x128xf32, #tpu.memory_space<vmem>>) attributes {dimension_semantics = [#tpu.dimension_semantics<parallel>], iteration_bounds = array<i64: 1>, scalar_prefetch = 0 : i64, scratch_operands = 0 : i64, tpu.core_type = #tpu.core_type<tc>, window_params = [{transform_indices = @transform_0, window_bounds = array<i64: 4, 16, 16>}, {pipeline_mode = #tpu.pipeline_mode<synchronous>, transform_indices = @transform_1, window_bounds = array<i64: 16, 32>}, {pipeline_mode = #tpu.pipeline_mode<synchronous>, transform_indices = @transform_2, window_bounds = array<i64: 32, 16>}, {transform_indices = @transform_3, window_bounds = array<i64: 32, 128>}]} {
    %c0 = arith.constant 0 : index
    %c0_0 = arith.constant 0 : index
    %0 = vector.load %arg2[%c0, %c0_0] : memref<16x32xf32, #tpu.memory_space<vmem>>, vector<16x32xf32>
    %c0_1 = arith.constant 0 : index
    %c0_2 = arith.constant 0 : index
    %1 = vector.load %arg3[%c0_1, %c0_2] : memref<32x16xf32, #tpu.memory_space<vmem>>, vector<32x16xf32>
    %c0_3 = arith.constant 0 : index
    %c0_4 = arith.constant 0 : index
    %c0_5 = arith.constant 0 : index
    %2 = vector.load %arg1[%c0_3, %c0_4, %c0_5] : memref<4x16x16xf32, #tpu.memory_space<vmem>>, vector<4x16x16xf32>
    %3 = vector.shape_cast %2 : vector<4x16x16xf32> to vector<64x16xf32>
    %cst = arith.constant dense<0.000000e+00> : vector<64x32xf32>
    %4 = tpu.matmul %3, %0, %cst {dimension_numbers = #tpu.dot_dimension_numbers<[1], [0], [0], [1], [0, 0, 1, 1], [], []>} : vector<64x16xf32>, vector<16x32xf32>, vector<64x32xf32> -> vector<64x32xf32>
    %5 = vector.extract_strided_slice %4 {offsets = [0, 0], sizes = [16, 32], strides = [1, 1]} : vector<64x32xf32> to vector<16x32xf32>
    %6 = vector.extract_strided_slice %4 {offsets = [16, 0], sizes = [16, 32], strides = [1, 1]} : vector<64x32xf32> to vector<16x32xf32>
    %7 = vector.extract_strided_slice %4 {offsets = [32, 0], sizes = [16, 32], strides = [1, 1]} : vector<64x32xf32> to vector<16x32xf32>
    %8 = vector.extract_strided_slice %4 {offsets = [48, 0], sizes = [16, 32], strides = [1, 1]} : vector<64x32xf32> to vector<16x32xf32>
    %cst_6 = arith.constant dense<0.000000e+00> : vector<32x32xf32>
    %9 = tpu.matmul %1, %5, %cst_6 {dimension_numbers = #tpu.dot_dimension_numbers<[1], [0], [0], [1], [0, 0, 1, 1], [], []>} : vector<32x16xf32>, vector<16x32xf32>, vector<32x32xf32> -> vector<32x32xf32>
    %c0_7 = arith.constant 0 : index
    %c0_8 = arith.constant 0 : index
    %10 = vector.load %arg4[%c0_7, %c0_8] : memref<32x128xf32, #tpu.memory_space<vmem>>, vector<32x32xf32>
    tpu.vector_store %arg4[%c0_7, %c0_8], %9 {strides = array<i32>} : memref<32x128xf32, #tpu.memory_space<vmem>>, vector<32x32xf32>,
    %cst_9 = arith.constant dense<0.000000e+00> : vector<32x32xf32>
    %11 = tpu.matmul %1, %6, %cst_9 {dimension_numbers = #tpu.dot_dimension_numbers<[1], [0], [0], [1], [0, 0, 1, 1], [], []>} : vector<32x16xf32>, vector<16x32xf32>, vector<32x32xf32> -> vector<32x32xf32>
    %c0_10 = arith.constant 0 : index
    %c32 = arith.constant 32 : index
    %12 = vector.load %arg4[%c0_10, %c32] : memref<32x128xf32, #tpu.memory_space<vmem>>, vector<32x32xf32>
    tpu.vector_store %arg4[%c0_10, %c32], %11 {strides = array<i32>} : memref<32x128xf32, #tpu.memory_space<vmem>>, vector<32x32xf32>,
    %cst_11 = arith.constant dense<0.000000e+00> : vector<32x32xf32>
    %13 = tpu.matmul %1, %7, %cst_11 {dimension_numbers = #tpu.dot_dimension_numbers<[1], [0], [0], [1], [0, 0, 1, 1], [], []>} : vector<32x16xf32>, vector<16x32xf32>, vector<32x32xf32> -> vector<32x32xf32>
    %c0_12 = arith.constant 0 : index
    %c64 = arith.constant 64 : index
    %14 = vector.load %arg4[%c0_12, %c64] : memref<32x128xf32, #tpu.memory_space<vmem>>, vector<32x32xf32>
    tpu.vector_store %arg4[%c0_12, %c64], %13 {strides = array<i32>} : memref<32x128xf32, #tpu.memory_space<vmem>>, vector<32x32xf32>,
    %cst_13 = arith.constant dense<0.000000e+00> : vector<32x32xf32>
    %15 = tpu.matmul %1, %8, %cst_13 {dimension_numbers = #tpu.dot_dimension_numbers<[1], [0], [0], [1], [0, 0, 1, 1], [], []>} : vector<32x16xf32>, vector<16x32xf32>, vector<32x32xf32> -> vector<32x32xf32>
    %c0_14 = arith.constant 0 : index
    %c96 = arith.constant 96 : index
    %16 = vector.load %arg4[%c0_14, %c96] : memref<32x128xf32, #tpu.memory_space<vmem>>, vector<32x32xf32>
    tpu.vector_store %arg4[%c0_14, %c96], %15 {strides = array<i32>} : memref<32x128xf32, #tpu.memory_space<vmem>>, vector<32x32xf32>,
    return
  }
  func.func @transform_0(%arg0: i32) -> (i32, i32, i32) {
    %c0_i32 = arith.constant 0 : i32
    %c0_i32_0 = arith.constant 0 : i32
    %c0_i32_1 = arith.constant 0 : i32
    return %arg0, %c0_i32, %c0_i32_0 : i32, i32, i32
  }
  func.func @transform_1(%arg0: i32) -> (i32, i32) {
    %c0_i32 = arith.constant 0 : i32
    %c0_i32_0 = arith.constant 0 : i32
    %c0_i32_1 = arith.constant 0 : i32
    return %c0_i32, %c0_i32_0 : i32, i32
  }
  func.func @transform_2(%arg0: i32) -> (i32, i32) {
    %c0_i32 = arith.constant 0 : i32
    %c0_i32_0 = arith.constant 0 : i32
    %c0_i32_1 = arith.constant 0 : i32
    return %c0_i32, %c0_i32_0 : i32, i32
  }
  func.func @transform_3(%arg0: i32) -> (i32, i32) {
    %c0_i32 = arith.constant 0 : i32
    %c0_i32_0 = arith.constant 0 : i32
    return %c0_i32, %arg0 : i32, i32
  }
}

</mosaic_0001>

<llo_original>
// kernel: tpu_custom_call.1
$region0: #{tpu_custom_call.1}
  #allocation0 [shape = 'u32[]', space=smem, size = 0x4, offset = 0x4, fixed_abs, tag = 'smem constant byte address 0x4 - core index']
  #allocation1 [shape = 'u32[144,128]{1,0:T(1,128)}', space=vmem, size = 0x12000, scoped, tag = 'internal scratch']
  %s0 = inlined_call_operand.hbm [shape: f32[4,16,16], index: 0, kind: input, shape index: {}]
  %s1 = inlined_call_operand.vmem [shape: f32[16,32], index: 1, kind: input, shape index: {}]
  %s2 = inlined_call_operand.vmem [shape: f32[32,16], index: 2, kind: input, shape index: {}]
  %s3 = inlined_call_operand.hbm [shape: f32[32,128], index: 3, kind: output, shape index: {}]
  %s4 = sld [smem:[#allocation0]]
  $region26: #{tpu_custom_call.1} parent=0
    _
  %s6 = ssub.s32 1, %s4
  %s7 = scalar_select 0, %s6, %s4
  $region1: #{tpu_custom_call.1} parent=0
    #allocation2 [shape = 'u8[32768]{0}', space=vmem, size = 0x8000, scoped, tag = 'input window, operand 0, single buffered']
    #allocation3 [shape = 's32[1]{0}', space=sflag, size = 0x4, scoped, tag = 'scoped memory for tpu_custom_call.1']
    #allocation4 [shape = 's32[1]{0}', space=sflag, size = 0x4, scoped, tag = 'scoped memory for tpu_custom_call.1']
    #allocation5 [shape = 'u8[16384]{0}', space=vmem, size = 0x4000, scoped, tag = 'output window, operand 0, single buffered']
    %8 = vsyncpa [#allocation3], 0
    %9 = vsyncpa [#allocation4], 0
    // Predicated region
    $region2: #{tpu_custom_call.1} parent=1 // pred_check
      _
    $region3: #{tpu_custom_call.1} parent=1 // pred_check_branch
      %11 = sbr.rel (0) target = $region5
    $region4: #{tpu_custom_call.1} parent=1 // pred_region
      %s13 = ssub.s32 1024, 1024
      %14 = vsyncadd [#allocation3], %s13
      %s15 = sshll.u32 [#allocation2], 4
      %s16 = int_to_ptr.vmem [resolvable:$true] %s15
      %21 = dma.hbm_to_vmem [thread:$0]  %s0, 1024, %s16, [#allocation3], 128, 128, 8
    $region5: #{tpu_custom_call.1} parent=1 // pred_fallthru
      _
    // Predicated region
    $region6: #{tpu_custom_call.1} parent=1 // pred_check
      _
    $region7: #{tpu_custom_call.1} parent=1 // pred_check_branch
      %23 = sbr.rel (0) target = $region9
    $region8: #{tpu_custom_call.1} parent=1 // pred_region
      _
    $region9: #{tpu_custom_call.1} parent=1 // pred_fallthru
      _
    // Predicated region
    $region10: #{tpu_custom_call.1} parent=1 // pred_check
      _
    $region11: #{tpu_custom_call.1} parent=1 // pred_check_branch
      %25 = sbr.rel (0) target = $region13
    $region12: #{tpu_custom_call.1} parent=1 // pred_region
      _
    $region13: #{tpu_custom_call.1} parent=1 // pred_fallthru
      _
    // Predicated region
    $region14: #{tpu_custom_call.1} parent=1 // pred_check
      _
    $region15: #{tpu_custom_call.1} parent=1 // pred_check_branch
      %27 = sbr.rel (0) target = $region17
    $region16: #{tpu_custom_call.1} parent=1 // pred_region
      %28 = dma.done [#allocation3], 1024
    $region17: #{tpu_custom_call.1} parent=1 // pred_fallthru
      _
    %v29 = vld [vmem:[%s1] sm:$0xff]
    %v30 = vld [vmem:[%s1 + $0x8] sm:$0xff]
    %v31 = vld [vmem:[%s2] sm:$0xff]
    %v32 = vld [vmem:[%s2 + $0x8] sm:$0xff]
    %v33 = vld [vmem:[%s2 + $0x10] sm:$0xff]
    %v34 = vld [vmem:[%s2 + $0x18] sm:$0xff]
    %v35 = vld [vmem:[#allocation2] sm:$0xff]
    %v36 = vld [vmem:[#allocation2 + $0x8] sm:$0xff]
    %v37 = vld [vmem:[#allocation2 + $0x10] sm:$0xff]
    %v38 = vld [vmem:[#allocation2 + $0x18] sm:$0xff]
    %v39 = vld [vmem:[#allocation2 + $0x20] sm:$0xff]
    %v40 = vld [vmem:[#allocation2 + $0x28] sm:$0xff]
    %v41 = vld [vmem:[#allocation2 + $0x30] sm:$0xff]
    %v42 = vld [vmem:[#allocation2 + $0x38] sm:$0xff]
    %vm43 = vcmask 130048
    %v45 = vsel %vm43, %v35, 0
    %v48 = vsel %vm43, %v36, 0
    %v51 = vsel %vm43, %v37, 0
    %v54 = vsel %vm43, %v38, 0
    %v57 = vsel %vm43, %v39, 0
    %v60 = vsel %vm43, %v40, 0
    %v63 = vsel %vm43, %v41, 0
    %v66 = vsel %vm43, %v42, 0
    %68 = vmatprep.subr.mxu0 0.0
    %69 = vmatpush1.msra.mxu0 %v29
    %70 = vmatprep.subr.mxu0 0.0
    %71 = vmatpush1.msra.mxu0 %v30
    %72 = vmatprep.subr.mxu0 0.0
    %73 = vmatpush1.msra.mxu0 0.0
    %74 = vmatprep.subr.mxu0 0.0
    %75 = vmatpush1.msra.mxu0 0.0
    %76 = vmatprep.subr.mxu0 0.0
    %77 = vmatpush1.msra.mxu0 0.0
    %78 = vmatprep.subr.mxu0 0.0
    %79 = vmatpush1.msra.mxu0 0.0
    %80 = vmatprep.subr.mxu0 0.0
    %81 = vmatpush1.msra.mxu0 0.0
    %82 = vmatprep.subr.mxu0 0.0
    %83 = vmatpush1.msra.mxu0 0.0
    %84 = vmatprep.subr.mxu0 0.0
    %85 = vmatpush1.msra.mxu0 0.0
    %86 = vmatprep.subr.mxu0 0.0
    %87 = vmatpush1.msra.mxu0 0.0
    %88 = vmatprep.subr.mxu0 0.0
    %89 = vmatpush1.msra.mxu0 0.0
    %90 = vmatprep.subr.mxu0 0.0
    %91 = vmatpush1.msra.mxu0 0.0
    %92 = vmatprep.subr.mxu0 0.0
    %93 = vmatpush1.msra.mxu0 0.0
    %94 = vmatprep.subr.mxu0 0.0
    %95 = vmatpush1.msra.mxu0 0.0
    %96 = vmatprep.subr.mxu0 0.0
    %97 = vmatpush1.msra.mxu0 0.0
    %98 = vmatprep.subr.mxu0 0.0
    %99 = vmatpush1.msra.mxu0 0.0
    %100 = vmatprep.subr.mxu0 0.0
    %101 = vmatpush1.msra.mxu0 0.0
    %102 = vmatprep.subr.mxu0 0.0
    %103 = vmatpush1.msra.mxu0 0.0
    %104 = vmatprep.subr.mxu0 0.0
    %105 = vmatpush1.msra.mxu0 0.0
    %106 = vmatprep.subr.mxu0 0.0
    %107 = vmatpush1.msra.mxu0 0.0
    %108 = vmatprep.subr.mxu0 0.0
    %109 = vmatpush1.msra.mxu0 0.0
    %110 = vmatprep.subr.mxu0 0.0
    %111 = vmatpush1.msra.mxu0 0.0
    %112 = vmatprep.subr.mxu0 0.0
    %113 = vmatpush1.msra.mxu0 0.0
    %114 = vmatprep.subr.mxu0 0.0
    %115 = vmatpush1.msra.mxu0 0.0
    %116 = vmatprep.subr.mxu0 0.0
    %117 = vmatpush1.msra.mxu0 0.0
    %118 = vmatprep.subr.mxu0 0.0
    %119 = vmatpush1.msra.mxu0 0.0
    %120 = vmatprep.subr.mxu0 0.0
    %121 = vmatpush1.msra.mxu0 0.0
    %122 = vmatprep.subr.mxu0 0.0
    %123 = vmatpush1.msra.mxu0 0.0
    %124 = vmatprep.subr.mxu0 0.0
    %125 = vmatpush1.msra.mxu0 0.0
    %126 = vmatprep.subr.mxu0 0.0
    %127 = vmatpush1.msra.mxu0 0.0
    %128 = vmatprep.subr.mxu0 0.0
    %129 = vmatpush1.msra.mxu0 0.0
    %130 = vmatprep.subr.mxu0 0.0
    %131 = vmatpush1.msra.mxu0 0.0
    %132 = vmatprep.mubr.f32.mxu0 0.0
    %133 = vmatmul.mubr.f32.gmra.mrb[0].mxu0 %v45
    %v134 = vpop.f32.mrb[0].mxu0
    %v135 = vadd.f32 0.0, %v134
    %v136 = vpop.f32.mrb[0].mxu0
    %137 = vmatprep.mubr.f32.mxu0 0.0
    %138 = vmatmul.mubr.f32.gmra.mrb[0].mxu0 %v48
    %v139 = vpop.f32.mrb[0].mxu0
    %v140 = vadd.f32 0.0, %v139
    %v141 = vpop.f32.mrb[0].mxu0
    %142 = vmatprep.mubr.f32.mxu0 0.0
    %143 = vmatmul.mubr.f32.gmra.mrb[0].mxu0 %v51
    %v144 = vpop.f32.mrb[0].mxu0
    %v145 = vadd.f32 0.0, %v144
    %v146 = vpop.f32.mrb[0].mxu0
    %147 = vmatprep.mubr.f32.mxu0 0.0
    %148 = vmatmul.mubr.f32.gmra.mrb[0].mxu0 %v54
    %v149 = vpop.f32.mrb[0].mxu0
    %v150 = vadd.f32 0.0, %v149
    %v151 = vpop.f32.mrb[0].mxu0
    %152 = vmatprep.mubr.f32.mxu0 0.0
    %153 = vmatmul.mubr.f32.gmra.mrb[0].mxu0 %v57
    %v154 = vpop.f32.mrb[0].mxu0
    %v155 = vadd.f32 0.0, %v154
    %v156 = vpop.f32.mrb[0].mxu0
    %157 = vmatprep.mubr.f32.mxu0 0.0
    %158 = vmatmul.mubr.f32.gmra.mrb[0].mxu0 %v60
    %v159 = vpop.f32.mrb[0].mxu0
    %v160 = vadd.f32 0.0, %v159
    %v161 = vpop.f32.mrb[0].mxu0
    %162 = vmatprep.mubr.f32.mxu0 0.0
    %163 = vmatmul.mubr.f32.gmra.mrb[0].mxu0 %v63
    %v164 = vpop.f32.mrb[0].mxu0
    %v165 = vadd.f32 0.0, %v164
    %v166 = vpop.f32.mrb[0].mxu0
    %167 = vmatprep.mubr.f32.mxu0 0.0
    %168 = vmatmul.mubr.f32.gmra.mrb[0].mxu0 %v66
    %v169 = vpop.f32.mrb[0].mxu0
    %v170 = vadd.f32 0.0, %v169
    %v171 = vpop.f32.mrb[0].mxu0
    %172 = vdwg.mxu0
    %v174 = vsel %vm43, %v31, 0
    %v177 = vsel %vm43, %v32, 0
    %v180 = vsel %vm43, %v33, 0
    %v183 = vsel %vm43, %v34, 0
    %185 = vmatprep.subr.mxu0 0.0
    %186 = vmatpush1.msra.mxu0 %v135
    %187 = vmatprep.subr.mxu0 0.0
    %188 = vmatpush1.msra.mxu0 %v140
    %189 = vmatprep.subr.mxu0 0.0
    %190 = vmatpush1.msra.mxu0 0.0
    %191 = vmatprep.subr.mxu0 0.0
    %192 = vmatpush1.msra.mxu0 0.0
    %193 = vmatprep.subr.mxu0 0.0
    %194 = vmatpush1.msra.mxu0 0.0
    %195 = vmatprep.subr.mxu0 0.0
    %196 = vmatpush1.msra.mxu0 0.0
    %197 = vmatprep.subr.mxu0 0.0
    %198 = vmatpush1.msra.mxu0 0.0
    %199 = vmatprep.subr.mxu0 0.0
    %200 = vmatpush1.msra.mxu0 0.0
    %201 = vmatprep.subr.mxu0 0.0
    %202 = vmatpush1.msra.mxu0 0.0
    %203 = vmatprep.subr.mxu0 0.0
    %204 = vmatpush1.msra.mxu0 0.0
    %205 = vmatprep.subr.mxu0 0.0
    %206 = vmatpush1.msra.mxu0 0.0
    %207 = vmatprep.subr.mxu0 0.0
    %208 = vmatpush1.msra.mxu0 0.0
    %209 = vmatprep.subr.mxu0 0.0
    %210 = vmatpush1.msra.mxu0 0.0
    %211 = vmatprep.subr.mxu0 0.0
    %212 = vmatpush1.msra.mxu0 0.0
    %213 = vmatprep.subr.mxu0 0.0
    %214 = vmatpush1.msra.mxu0 0.0
    %215 = vmatprep.subr.mxu0 0.0
    %216 = vmatpush1.msra.mxu0 0.0
    %217 = vmatprep.subr.mxu0 0.0
    %218 = vmatpush1.msra.mxu0 0.0
    %219 = vmatprep.subr.mxu0 0.0
    %220 = vmatpush1.msra.mxu0 0.0
    %221 = vmatprep.subr.mxu0 0.0
    %222 = vmatpush1.msra.mxu0 0.0
    %223 = vmatprep.subr.mxu0 0.0
    %224 = vmatpush1.msra.mxu0 0.0
    %225 = vmatprep.subr.mxu0 0.0
    %226 = vmatpush1.msra.mxu0 0.0
    %227 = vmatprep.subr.mxu0 0.0
    %228 = vmatpush1.msra.mxu0 0.0
    %229 = vmatprep.subr.mxu0 0.0
    %230 = vmatpush1.msra.mxu0 0.0
    %231 = vmatprep.subr.mxu0 0.0
    %232 = vmatpush1.msra.mxu0 0.0
    %233 = vmatprep.subr.mxu0 0.0
    %234 = vmatpush1.msra.mxu0 0.0
    %235 = vmatprep.subr.mxu0 0.0
    %236 = vmatpush1.msra.mxu0 0.0
    %237 = vmatprep.subr.mxu0 0.0
    %238 = vmatpush1.msra.mxu0 0.0
    %239 = vmatprep.subr.mxu0 0.0
    %240 = vmatpush1.msra.mxu0 0.0
    %241 = vmatprep.subr.mxu0 0.0
    %242 = vmatpush1.msra.mxu0 0.0
    %243 = vmatprep.subr.mxu0 0.0
    %244 = vmatpush1.msra.mxu0 0.0
    %245 = vmatprep.subr.mxu0 0.0
    %246 = vmatpush1.msra.mxu0 0.0
    %247 = vmatprep.subr.mxu0 0.0
    %248 = vmatpush1.msra.mxu0 0.0
    %249 = vmatprep.mubr.f32.mxu0 0.0
    %250 = vmatmul.mubr.f32.gmra.mrb[0].mxu0 %v174
    %v251 = vpop.f32.mrb[0].mxu0
    %v252 = vadd.f32 0.0, %v251
    %v253 = vpop.f32.mrb[0].mxu0
    %254 = vmatprep.mubr.f32.mxu0 0.0
    %255 = vmatmul.mubr.f32.gmra.mrb[0].mxu0 %v177
    %v256 = vpop.f32.mrb[0].mxu0
    %v257 = vadd.f32 0.0, %v256
    %v258 = vpop.f32.mrb[0].mxu0
    %259 = vmatprep.mubr.f32.mxu0 0.0
    %260 = vmatmul.mubr.f32.gmra.mrb[0].mxu0 %v180
    %v261 = vpop.f32.mrb[0].mxu0
    %v262 = vadd.f32 0.0, %v261
    %v263 = vpop.f32.mrb[0].mxu0
    %264 = vmatprep.mubr.f32.mxu0 0.0
    %265 = vmatmul.mubr.f32.gmra.mrb[0].mxu0 %v183
    %v266 = vpop.f32.mrb[0].mxu0
    %v267 = vadd.f32 0.0, %v266
    %v268 = vpop.f32.mrb[0].mxu0
    %269 = vdwg.mxu0
    %vm270 = vcmask 261120
    %271 = vst.msk [vmem:[#allocation5] sm:$0xff] %vm270, %v252
    %272 = vst.msk [vmem:[#allocation5 + $0x8] sm:$0xff] %vm270, %v257
    %273 = vst.msk [vmem:[#allocation5 + $0x10] sm:$0xff] %vm270, %v262
    %274 = vst.msk [vmem:[#allocation5 + $0x18] sm:$0xff] %vm270, %v267
    %275 = vmatprep.subr.mxu0 0.0
    %276 = vmatpush1.msra.mxu0 %v145
    %277 = vmatprep.subr.mxu0 0.0
    %278 = vmatpush1.msra.mxu0 %v150
    %279 = vmatprep.subr.mxu0 0.0
    %280 = vmatpush1.msra.mxu0 0.0
    %281 = vmatprep.subr.mxu0 0.0
    %282 = vmatpush1.msra.mxu0 0.0
    %283 = vmatprep.subr.mxu0 0.0
    %284 = vmatpush1.msra.mxu0 0.0
    %285 = vmatprep.subr.mxu0 0.0
    %286 = vmatpush1.msra.mxu0 0.0
    %287 = vmatprep.subr.mxu0 0.0
    %288 = vmatpush1.msra.mxu0 0.0
    %289 = vmatprep.subr.mxu0 0.0
    %290 = vmatpush1.msra.mxu0 0.0
    %291 = vmatprep.subr.mxu0 0.0
    %292 = vmatpush1.msra.mxu0 0.0
    %293 = vmatprep.subr.mxu0 0.0
    %294 = vmatpush1.msra.mxu0 0.0
    %295 = vmatprep.subr.mxu0 0.0
    %296 = vmatpush1.msra.mxu0 0.0
    %297 = vmatprep.subr.mxu0 0.0
    %298 = vmatpush1.msra.mxu0 0.0
    %299 = vmatprep.subr.mxu0 0.0
    %300 = vmatpush1.msra.mxu0 0.0
    %301 = vmatprep.subr.mxu0 0.0
    %302 = vmatpush1.msra.mxu0 0.0
    %303 = vmatprep.subr.mxu0 0.0
    %304 = vmatpush1.msra.mxu0 0.0
    %305 = vmatprep.subr.mxu0 0.0
    %306 = vmatpush1.msra.mxu0 0.0
    %307 = vmatprep.subr.mxu0 0.0
    %308 = vmatpush1.msra.mxu0 0.0
    %309 = vmatprep.subr.mxu0 0.0
    %310 = vmatpush1.msra.mxu0 0.0
    %311 = vmatprep.subr.mxu0 0.0
    %312 = vmatpush1.msra.mxu0 0.0
    %313 = vmatprep.subr.mxu0 0.0
    %314 = vmatpush1.msra.mxu0 0.0
    %315 = vmatprep.subr.mxu0 0.0
    %316 = vmatpush1.msra.mxu0 0.0
    %317 = vmatprep.subr.mxu0 0.0
    %318 = vmatpush1.msra.mxu0 0.0
    %319 = vmatprep.subr.mxu0 0.0
    %320 = vmatpush1.msra.mxu0 0.0
    %321 = vmatprep.subr.mxu0 0.0
    %322 = vmatpush1.msra.mxu0 0.0
    %323 = vmatprep.subr.mxu0 0.0
    %324 = vmatpush1.msra.mxu0 0.0
    %325 = vmatprep.subr.mxu0 0.0
    %326 = vmatpush1.msra.mxu0 0.0
    %327 = vmatprep.subr.mxu0 0.0
    %328 = vmatpush1.msra.mxu0 0.0
    %329 = vmatprep.subr.mxu0 0.0
    %330 = vmatpush1.msra.mxu0 0.0
    %331 = vmatprep.subr.mxu0 0.0
    %332 = vmatpush1.msra.mxu0 0.0
    %333 = vmatprep.subr.mxu0 0.0
    %334 = vmatpush1.msra.mxu0 0.0
    %335 = vmatprep.subr.mxu0 0.0
    %336 = vmatpush1.msra.mxu0 0.0
    %337 = vmatprep.subr.mxu0 0.0
    %338 = vmatpush1.msra.mxu0 0.0
    %339 = vmatprep.mubr.f32.mxu0 0.0
    %340 = vmatmul.mubr.f32.gmra.mrb[0].mxu0 %v174
    %v341 = vpop.f32.mrb[0].mxu0
    %v342 = vadd.f32 0.0, %v341
    %v343 = vpop.f32.mrb[0].mxu0
    %344 = vmatprep.mubr.f32.mxu0 0.0
    %345 = vmatmul.mubr.f32.gmra.mrb[0].mxu0 %v177
    %v346 = vpop.f32.mrb[0].mxu0
    %v347 = vadd.f32 0.0, %v346
    %v348 = vpop.f32.mrb[0].mxu0
    %349 = vmatprep.mubr.f32.mxu0 0.0
    %350 = vmatmul.mubr.f32.gmra.mrb[0].mxu0 %v180
    %v351 = vpop.f32.mrb[0].mxu0
    %v352 = vadd.f32 0.0, %v351
    %v353 = vpop.f32.mrb[0].mxu0
    %354 = vmatprep.mubr.f32.mxu0 0.0
    %355 = vmatmul.mubr.f32.gmra.mrb[0].mxu0 %v183
    %v356 = vpop.f32.mrb[0].mxu0
    %v357 = vadd.f32 0.0, %v356
    %v358 = vpop.f32.mrb[0].mxu0
    %359 = vdwg.mxu0
    %364 = vrot.lane.b32.xlu0 %v342, 32
    %v365 = vpop.permute.xlu0 %364
    %366 = vrot.lane.b32.xlu0 %v347, 32
    %v367 = vpop.permute.xlu0 %366
    %368 = vrot.lane.b32.xlu0 %v352, 32
    %v369 = vpop.permute.xlu0 %368
    %370 = vrot.lane.b32.xlu0 %v357, 32
    %v371 = vpop.permute.xlu0 %370
    %vm376 = vcmask 523520
    %377 = vst.msk [vmem:[#allocation5] sm:$0xff] %vm376, %v365
    %378 = vst.msk [vmem:[#allocation5 + $0x8] sm:$0xff] %vm376, %v367
    %379 = vst.msk [vmem:[#allocation5 + $0x10] sm:$0xff] %vm376, %v369
    %380 = vst.msk [vmem:[#allocation5 + $0x18] sm:$0xff] %vm376, %v371
    %381 = vmatprep.subr.mxu0 0.0
    %382 = vmatpush1.msra.mxu0 %v155
    %383 = vmatprep.subr.mxu0 0.0
    %384 = vmatpush1.msra.mxu0 %v160
    %385 = vmatprep.subr.mxu0 0.0
    %386 = vmatpush1.msra.mxu0 0.0
    %387 = vmatprep.subr.mxu0 0.0
    %388 = vmatpush1.msra.mxu0 0.0
    %389 = vmatprep.subr.mxu0 0.0
    %390 = vmatpush1.msra.mxu0 0.0
    %391 = vmatprep.subr.mxu0 0.0
    %392 = vmatpush1.msra.mxu0 0.0
    %393 = vmatprep.subr.mxu0 0.0
    %394 = vmatpush1.msra.mxu0 0.0
    %395 = vmatprep.subr.mxu0 0.0
    %396 = vmatpush1.msra.mxu0 0.0
    %397 = vmatprep.subr.mxu0 0.0
    %398 = vmatpush1.msra.mxu0 0.0
    %399 = vmatprep.subr.mxu0 0.0
    %400 = vmatpush1.msra.mxu0 0.0
    %401 = vmatprep.subr.mxu0 0.0
    %402 = vmatpush1.msra.mxu0 0.0
    %403 = vmatprep.subr.mxu0 0.0
    %404 = vmatpush1.msra.mxu0 0.0
    %405 = vmatprep.subr.mxu0 0.0
    %406 = vmatpush1.msra.mxu0 0.0
    %407 = vmatprep.subr.mxu0 0.0
    %408 = vmatpush1.msra.mxu0 0.0
    %409 = vmatprep.subr.mxu0 0.0
    %410 = vmatpush1.msra.mxu0 0.0
    %411 = vmatprep.subr.mxu0 0.0
    %412 = vmatpush1.msra.mxu0 0.0
    %413 = vmatprep.subr.mxu0 0.0
    %414 = vmatpush1.msra.mxu0 0.0
    %415 = vmatprep.subr.mxu0 0.0
    %416 = vmatpush1.msra.mxu0 0.0
    %417 = vmatprep.subr.mxu0 0.0
    %418 = vmatpush1.msra.mxu0 0.0
    %419 = vmatprep.subr.mxu0 0.0
    %420 = vmatpush1.msra.mxu0 0.0
    %421 = vmatprep.subr.mxu0 0.0
    %422 = vmatpush1.msra.mxu0 0.0
    %423 = vmatprep.subr.mxu0 0.0
    %424 = vmatpush1.msra.mxu0 0.0
    %425 = vmatprep.subr.mxu0 0.0
    %426 = vmatpush1.msra.mxu0 0.0
    %427 = vmatprep.subr.mxu0 0.0
    %428 = vmatpush1.msra.mxu0 0.0
    %429 = vmatprep.subr.mxu0 0.0
    %430 = vmatpush1.msra.mxu0 0.0
    %431 = vmatprep.subr.mxu0 0.0
    %432 = vmatpush1.msra.mxu0 0.0
    %433 = vmatprep.subr.mxu0 0.0
    %434 = vmatpush1.msra.mxu0 0.0
    %435 = vmatprep.subr.mxu0 0.0
    %436 = vmatpush1.msra.mxu0 0.0
    %437 = vmatprep.subr.mxu0 0.0
    %438 = vmatpush1.msra.mxu0 0.0
    %439 = vmatprep.subr.mxu0 0.0
    %440 = vmatpush1.msra.mxu0 0.0
    %441 = vmatprep.subr.mxu0 0.0
    %442 = vmatpush1.msra.mxu0 0.0
    %443 = vmatprep.subr.mxu0 0.0
    %444 = vmatpush1.msra.mxu0 0.0
    %445 = vmatprep.mubr.f32.mxu0 0.0
    %446 = vmatmul.mubr.f32.gmra.mrb[0].mxu0 %v174
    %v447 = vpop.f32.mrb[0].mxu0
    %v448 = vadd.f32 0.0, %v447
    %v449 = vpop.f32.mrb[0].mxu0
    %450 = vmatprep.mubr.f32.mxu0 0.0
    %451 = vmatmul.mubr.f32.gmra.mrb[0].mxu0 %v177
    %v452 = vpop.f32.mrb[0].mxu0
    %v453 = vadd.f32 0.0, %v452
    %v454 = vpop.f32.mrb[0].mxu0
    %455 = vmatprep.mubr.f32.mxu0 0.0
    %456 = vmatmul.mubr.f32.gmra.mrb[0].mxu0 %v180
    %v457 = vpop.f32.mrb[0].mxu0
    %v458 = vadd.f32 0.0, %v457
    %v459 = vpop.f32.mrb[0].mxu0
    %460 = vmatprep.mubr.f32.mxu0 0.0
    %461 = vmatmul.mubr.f32.gmra.mrb[0].mxu0 %v183
    %v462 = vpop.f32.mrb[0].mxu0
    %v463 = vadd.f32 0.0, %v462
    %v464 = vpop.f32.mrb[0].mxu0
    %465 = vdwg.mxu0
    %470 = vrot.lane.b32.xlu0 %v448, 64
    %v471 = vpop.permute.xlu0 %470
    %472 = vrot.lane.b32.xlu0 %v453, 64
    %v473 = vpop.permute.xlu0 %472
    %474 = vrot.lane.b32.xlu0 %v458, 64
    %v475 = vpop.permute.xlu0 %474
    %476 = vrot.lane.b32.xlu0 %v463, 64
    %v477 = vpop.permute.xlu0 %476
    %vm482 = vcmask 785920
    %483 = vst.msk [vmem:[#allocation5] sm:$0xff] %vm482, %v471
    %484 = vst.msk [vmem:[#allocation5 + $0x8] sm:$0xff] %vm482, %v473
    %485 = vst.msk [vmem:[#allocation5 + $0x10] sm:$0xff] %vm482, %v475
    %486 = vst.msk [vmem:[#allocation5 + $0x18] sm:$0xff] %vm482, %v477
    %487 = vmatprep.subr.mxu0 0.0
    %488 = vmatpush1.msra.mxu0 %v165
    %489 = vmatprep.subr.mxu0 0.0
    %490 = vmatpush1.msra.mxu0 %v170
    %491 = vmatprep.subr.mxu0 0.0
    %492 = vmatpush1.msra.mxu0 0.0
    %493 = vmatprep.subr.mxu0 0.0
    %494 = vmatpush1.msra.mxu0 0.0
    %495 = vmatprep.subr.mxu0 0.0
    %496 = vmatpush1.msra.mxu0 0.0
    %497 = vmatprep.subr.mxu0 0.0
    %498 = vmatpush1.msra.mxu0 0.0
    %499 = vmatprep.subr.mxu0 0.0
    %500 = vmatpush1.msra.mxu0 0.0
    %501 = vmatprep.subr.mxu0 0.0
    %502 = vmatpush1.msra.mxu0 0.0
    %503 = vmatprep.subr.mxu0 0.0
    %504 = vmatpush1.msra.mxu0 0.0
    %505 = vmatprep.subr.mxu0 0.0
    %506 = vmatpush1.msra.mxu0 0.0
    %507 = vmatprep.subr.mxu0 0.0
    %508 = vmatpush1.msra.mxu0 0.0
    %509 = vmatprep.subr.mxu0 0.0
    %510 = vmatpush1.msra.mxu0 0.0
    %511 = vmatprep.subr.mxu0 0.0
    %512 = vmatpush1.msra.mxu0 0.0
    %513 = vmatprep.subr.mxu0 0.0
    %514 = vmatpush1.msra.mxu0 0.0
    %515 = vmatprep.subr.mxu0 0.0
    %516 = vmatpush1.msra.mxu0 0.0
    %517 = vmatprep.subr.mxu0 0.0
    %518 = vmatpush1.msra.mxu0 0.0
    %519 = vmatprep.subr.mxu0 0.0
    %520 = vmatpush1.msra.mxu0 0.0
    %521 = vmatprep.subr.mxu0 0.0
    %522 = vmatpush1.msra.mxu0 0.0
    %523 = vmatprep.subr.mxu0 0.0
    %524 = vmatpush1.msra.mxu0 0.0
    %525 = vmatprep.subr.mxu0 0.0
    %526 = vmatpush1.msra.mxu0 0.0
    %527 = vmatprep.subr.mxu0 0.0
    %528 = vmatpush1.msra.mxu0 0.0
    %529 = vmatprep.subr.mxu0 0.0
    %530 = vmatpush1.msra.mxu0 0.0
    %531 = vmatprep.subr.mxu0 0.0
    %532 = vmatpush1.msra.mxu0 0.0
    %533 = vmatprep.subr.mxu0 0.0
    %534 = vmatpush1.msra.mxu0 0.0
    %535 = vmatprep.subr.mxu0 0.0
    %536 = vmatpush1.msra.mxu0 0.0
    %537 = vmatprep.subr.mxu0 0.0
    %538 = vmatpush1.msra.mxu0 0.0
    %539 = vmatprep.subr.mxu0 0.0
    %540 = vmatpush1.msra.mxu0 0.0
    %541 = vmatprep.subr.mxu0 0.0
    %542 = vmatpush1.msra.mxu0 0.0
    %543 = vmatprep.subr.mxu0 0.0
    %544 = vmatpush1.msra.mxu0 0.0
    %545 = vmatprep.subr.mxu0 0.0
    %546 = vmatpush1.msra.mxu0 0.0
    %547 = vmatprep.subr.mxu0 0.0
    %548 = vmatpush1.msra.mxu0 0.0
    %549 = vmatprep.subr.mxu0 0.0
    %550 = vmatpush1.msra.mxu0 0.0
    %551 = vmatprep.mubr.f32.mxu0 0.0
    %552 = vmatmul.mubr.f32.gmra.mrb[0].mxu0 %v174
    %v553 = vpop.f32.mrb[0].mxu0
    %v554 = vadd.f32 0.0, %v553
    %v555 = vpop.f32.mrb[0].mxu0
    %556 = vmatprep.mubr.f32.mxu0 0.0
    %557 = vmatmul.mubr.f32.gmra.mrb[0].mxu0 %v177
    %v558 = vpop.f32.mrb[0].mxu0
    %v559 = vadd.f32 0.0, %v558
    %v560 = vpop.f32.mrb[0].mxu0
    %561 = vmatprep.mubr.f32.mxu0 0.0
    %562 = vmatmul.mubr.f32.gmra.mrb[0].mxu0 %v180
    %v563 = vpop.f32.mrb[0].mxu0
    %v564 = vadd.f32 0.0, %v563
    %v565 = vpop.f32.mrb[0].mxu0
    %566 = vmatprep.mubr.f32.mxu0 0.0
    %567 = vmatmul.mubr.f32.gmra.mrb[0].mxu0 %v183
    %v568 = vpop.f32.mrb[0].mxu0
    %v569 = vadd.f32 0.0, %v568
    %v570 = vpop.f32.mrb[0].mxu0
    %571 = vdwg.mxu0
    %576 = vrot.lane.b32.xlu0 %v554, 96
    %v577 = vpop.permute.xlu0 %576
    %578 = vrot.lane.b32.xlu0 %v559, 96
    %v579 = vpop.permute.xlu0 %578
    %580 = vrot.lane.b32.xlu0 %v564, 96
    %v581 = vpop.permute.xlu0 %580
    %582 = vrot.lane.b32.xlu0 %v569, 96
    %v583 = vpop.permute.xlu0 %582
    %vm588 = vcmask 1048320
    %589 = vst.msk [vmem:[#allocation5] sm:$0xff] %vm588, %v577
    %590 = vst.msk [vmem:[#allocation5 + $0x8] sm:$0xff] %vm588, %v579
    %591 = vst.msk [vmem:[#allocation5 + $0x10] sm:$0xff] %vm588, %v581
    %592 = vst.msk [vmem:[#allocation5 + $0x18] sm:$0xff] %vm588, %v583
    // Predicated region
    $region18: #{tpu_custom_call.1} parent=1 // pred_check
      _
    $region19: #{tpu_custom_call.1} parent=1 // pred_check_branch
      %594 = sbr.rel (0) target = $region21
    $region20: #{tpu_custom_call.1} parent=1 // pred_region
      %s596 = ssub.s32 512, 512
      %597 = vsyncadd [#allocation4], %s596
      %s598 = sshll.u32 [#allocation5], 4
      %s599 = int_to_ptr.vmem [resolvable:$true] %s598
      %604 = dma.vmem_to_hbm [thread:$0]  %s599, 512, %s3, [#allocation4], 128, 128, 8
    $region21: #{tpu_custom_call.1} parent=1 // pred_fallthru
      _
    // Predicated region
    $region22: #{tpu_custom_call.1} parent=1 // pred_check
      _
    $region23: #{tpu_custom_call.1} parent=1 // pred_check_branch
      %606 = sbr.rel (0) target = $region25
    $region24: #{tpu_custom_call.1} parent=1 // pred_region
      %607 = dma.done [#allocation4], 512
    $region25: #{tpu_custom_call.1} parent=1 // pred_fallthru
      _
    %608 = vsyncpa [#allocation3], 1
    %609 = vsyncpa [#allocation4], 1

// kernel: tpu_custom_call.1
$region0: #{tpu_custom_call.1}
  #allocation0 [shape = 'u32[]', space=smem, size = 0x4, offset = 0x4, fixed_abs, tag = 'smem constant byte address 0x4 - core index']
  #allocation1 [shape = 'u32[144,128]{1,0:T(1,128)}', space=vmem, size = 0x12000, scoped, tag = 'internal scratch']
  %s0 = inlined_call_operand.hbm [shape: f32[4,16,16], index: 0, kind: input, shape index: {}]
  %s1 = inlined_call_operand.vmem [shape: f32[16,32], index: 1, kind: input, shape index: {}]
  %s2 = inlined_call_operand.vmem [shape: f32[32,16], index: 2, kind: input, shape index: {}]
  %s3 = inlined_call_operand.hbm [shape: f32[32,128], index: 3, kind: output, shape index: {}]
  %s4 = sld [smem:[#allocation0]]
  $region26: #{tpu_custom_call.1} parent=0
    _
  %s6 = ssub.s32 1, %s4
  %s7 = scalar_select 0, %s6, %s4
  $region1: #{tpu_custom_call.1} parent=0
    #allocation2 [shape = 'u8[32768]{0}', space=vmem, size = 0x8000, scoped, tag = 'input window, operand 0, single buffered']
    #allocation3 [shape = 's32[1]{0}', space=sflag, size = 0x4, scoped, tag = 'scoped memory for tpu_custom_call.1']
    #allocation4 [shape = 's32[1]{0}', space=sflag, size = 0x4, scoped, tag = 'scoped memory for tpu_custom_call.1']
    #allocation5 [shape = 'u8[16384]{0}', space=vmem, size = 0x4000, scoped, tag = 'output window, operand 0, single buffered']
    %8 = vsyncpa [#allocation3], 0
    %9 = vsyncpa [#allocation4], 0
    // Predicated region
    $region2: #{tpu_custom_call.1} parent=1 // pred_check
      _
    $region3: #{tpu_custom_call.1} parent=1 // pred_check_branch
      %11 = sbr.rel (0) target = $region5
    $region4: #{tpu_custom_call.1} parent=1 // pred_region
      %s13 = ssub.s32 1024, 1024
      %14 = vsyncadd [#allocation3], %s13
      %s15 = sshll.u32 [#allocation2], 4
      %s16 = int_to_ptr.vmem [resolvable:$true] %s15
      %21 = dma.hbm_to_vmem [thread:$0]  %s0, 1024, %s16, [#allocation3], 128, 128, 8
    $region5: #{tpu_custom_call.1} parent=1 // pred_fallthru
      _
    // Predicated region
    $region6: #{tpu_custom_call.1} parent=1 // pred_check
      _
    $region7: #{tpu_custom_call.1} parent=1 // pred_check_branch
      %23 = sbr.rel (0) target = $region9
    $region8: #{tpu_custom_call.1} parent=1 // pred_region
      _
    $region9: #{tpu_custom_call.1} parent=1 // pred_fallthru
      _
    // Predicated region
    $region10: #{tpu_custom_call.1} parent=1 // pred_check
      _
    $region11: #{tpu_custom_call.1} parent=1 // pred_check_branch
      %25 = sbr.rel (0) target = $region13
    $region12: #{tpu_custom_call.1} parent=1 // pred_region
      _
    $region13: #{tpu_custom_call.1} parent=1 // pred_fallthru
      _
    // Predicated region
    $region14: #{tpu_custom_call.1} parent=1 // pred_check
      _
    $region15: #{tpu_custom_call.1} parent=1 // pred_check_branch
      %27 = sbr.rel (0) target = $region17
    $region16: #{tpu_custom_call.1} parent=1 // pred_region
      %28 = dma.done [#allocation3], 1024
    $region17: #{tpu_custom_call.1} parent=1 // pred_fallthru
      _
    %v29 = vld [vmem:[%s1] sm:$0xff]
    %v30 = vld [vmem:[%s1 + $0x8] sm:$0xff]
    %v31 = vld [vmem:[%s2] sm:$0xff]
    %v32 = vld [vmem:[%s2 + $0x8] sm:$0xff]
    %v33 = vld [vmem:[%s2 + $0x10] sm:$0xff]
    %v34 = vld [vmem:[%s2 + $0x18] sm:$0xff]
    %v35 = vld [vmem:[#allocation2] sm:$0xff]
    %v36 = vld [vmem:[#allocation2 + $0x8] sm:$0xff]
    %v37 = vld [vmem:[#allocation2 + $0x10] sm:$0xff]
    %v38 = vld [vmem:[#allocation2 + $0x18] sm:$0xff]
    %v39 = vld [vmem:[#allocation2 + $0x20] sm:$0xff]
    %v40 = vld [vmem:[#allocation2 + $0x28] sm:$0xff]
    %v41 = vld [vmem:[#allocation2 + $0x30] sm:$0xff]
    %v42 = vld [vmem:[#allocation2 + $0x38] sm:$0xff]
    %vm43 = vcmask 130048
    %v45 = vsel %vm43, %v35, 0
    %v48 = vsel %vm43, %v36, 0
    %v51 = vsel %vm43, %v37, 0
    %v54 = vsel %vm43, %v38, 0
    %v57 = vsel %vm43, %v39, 0
    %v60 = vsel %vm43, %v40, 0
    %v63 = vsel %vm43, %v41, 0
    %v66 = vsel %vm43, %v42, 0
    %68 = vmatprep.subr.mxu0 0.0
    %69 = vmatpush1.msra.mxu0 %v29
    %70 = vmatprep.subr.mxu0 0.0
    %71 = vmatpush1.msra.mxu0 %v30
    %72 = vmatprep.subr.mxu0 0.0
    %73 = vmatpush1.msra.mxu0 0.0
    %74 = vmatprep.subr.mxu0 0.0
    %75 = vmatpush1.msra.mxu0 0.0
    %76 = vmatprep.subr.mxu0 0.0
    %77 = vmatpush1.msra.mxu0 0.0
    %78 = vmatprep.subr.mxu0 0.0
    %79 = vmatpush1.msra.mxu0 0.0
    %80 = vmatprep.subr.mxu0 0.0
    %81 = vmatpush1.msra.mxu0 0.0
    %82 = vmatprep.subr.mxu0 0.0
    %83 = vmatpush1.msra.mxu0 0.0
    %84 = vmatprep.subr.mxu0 0.0
    %85 = vmatpush1.msra.mxu0 0.0
    %86 = vmatprep.subr.mxu0 0.0
    %87 = vmatpush1.msra.mxu0 0.0
    %88 = vmatprep.subr.mxu0 0.0
    %89 = vmatpush1.msra.mxu0 0.0
    %90 = vmatprep.subr.mxu0 0.0
    %91 = vmatpush1.msra.mxu0 0.0
    %92 = vmatprep.subr.mxu0 0.0
    %93 = vmatpush1.msra.mxu0 0.0
    %94 = vmatprep.subr.mxu0 0.0
    %95 = vmatpush1.msra.mxu0 0.0
    %96 = vmatprep.subr.mxu0 0.0
    %97 = vmatpush1.msra.mxu0 0.0
    %98 = vmatprep.subr.mxu0 0.0
    %99 = vmatpush1.msra.mxu0 0.0
    %100 = vmatprep.subr.mxu0 0.0
    %101 = vmatpush1.msra.mxu0 0.0
    %102 = vmatprep.subr.mxu0 0.0
    %103 = vmatpush1.msra.mxu0 0.0
    %104 = vmatprep.subr.mxu0 0.0
    %105 = vmatpush1.msra.mxu0 0.0
    %106 = vmatprep.subr.mxu0 0.0
    %107 = vmatpush1.msra.mxu0 0.0
    %108 = vmatprep.subr.mxu0 0.0
    %109 = vmatpush1.msra.mxu0 0.0
    %110 = vmatprep.subr.mxu0 0.0
    %111 = vmatpush1.msra.mxu0 0.0
    %112 = vmatprep.subr.mxu0 0.0
    %113 = vmatpush1.msra.mxu0 0.0
    %114 = vmatprep.subr.mxu0 0.0
    %115 = vmatpush1.msra.mxu0 0.0
    %116 = vmatprep.subr.mxu0 0.0
    %117 = vmatpush1.msra.mxu0 0.0
    %118 = vmatprep.subr.mxu0 0.0
    %119 = vmatpush1.msra.mxu0 0.0
    %120 = vmatprep.subr.mxu0 0.0
    %121 = vmatpush1.msra.mxu0 0.0
    %122 = vmatprep.subr.mxu0 0.0
    %123 = vmatpush1.msra.mxu0 0.0
    %124 = vmatprep.subr.mxu0 0.0
    %125 = vmatpush1.msra.mxu0 0.0
    %126 = vmatprep.subr.mxu0 0.0
    %127 = vmatpush1.msra.mxu0 0.0
    %128 = vmatprep.subr.mxu0 0.0
    %129 = vmatpush1.msra.mxu0 0.0
    %130 = vmatprep.subr.mxu0 0.0
    %131 = vmatpush1.msra.mxu0 0.0
    %132 = vmatprep.mubr.f32.mxu0 0.0
    %133 = vmatmul.mubr.f32.gmra.mrb[0].mxu0 %v45
    %v134 = vpop.f32.mrb[0].mxu0
    %v135 = vadd.f32 0.0, %v134
    %v136 = vpop.f32.mrb[0].mxu0
    %137 = vmatprep.mubr.f32.mxu0 0.0
    %138 = vmatmul.mubr.f32.gmra.mrb[0].mxu0 %v48
    %v139 = vpop.f32.mrb[0].mxu0
    %v140 = vadd.f32 0.0, %v139
    %v141 = vpop.f32.mrb[0].mxu0
    %142 = vmatprep.mubr.f32.mxu0 0.0
    %143 = vmatmul.mubr.f32.gmra.mrb[0].mxu0 %v51
    %v144 = vpop.f32.mrb[0].mxu0
    %v145 = vadd.f32 0.0, %v144
    %v146 = vpop.f32.mrb[0].mxu0
    %147 = vmatprep.mubr.f32.mxu0 0.0
    %148 = vmatmul.mubr.f32.gmra.mrb[0].mxu0 %v54
    %v149 = vpop.f32.mrb[0].mxu0
    %v150 = vadd.f32 0.0, %v149
    %v151 = vpop.f32.mrb[0].mxu0
    %152 = vmatprep.mubr.f32.mxu0 0.0
    %153 = vmatmul.mubr.f32.gmra.mrb[0].mxu0 %v57
    %v154 = vpop.f32.mrb[0].mxu0
    %v155 = vadd.f32 0.0, %v154
    %v156 = vpop.f32.mrb[0].mxu0
    %157 = vmatprep.mubr.f32.mxu0 0.0
    %158 = vmatmul.mubr.f32.gmra.mrb[0].mxu0 %v60
    %v159 = vpop.f32.mrb[0].mxu0
    %v160 = vadd.f32 0.0, %v159
    %v161 = vpop.f32.mrb[0].mxu0
    %162 = vmatprep.mubr.f32.mxu0 0.0
    %163 = vmatmul.mubr.f32.gmra.mrb[0].mxu0 %v63
    %v164 = vpop.f32.mrb[0].mxu0
    %v165 = vadd.f32 0.0, %v164
    %v166 = vpop.f32.mrb[0].mxu0
    %167 = vmatprep.mubr.f32.mxu0 0.0
    %168 = vmatmul.mubr.f32.gmra.mrb[0].mxu0 %v66
    %v169 = vpop.f32.mrb[0].mxu0
    %v170 = vadd.f32 0.0, %v169
    %v171 = vpop.f32.mrb[0].mxu0
    %172 = vdwg.mxu0
    %v174 = vsel %vm43, %v31, 0
    %v177 = vsel %vm43, %v32, 0
    %v180 = vsel %vm43, %v33, 0
    %v183 = vsel %vm43, %v34, 0
    %185 = vmatprep.subr.mxu0 0.0
    %186 = vmatpush1.msra.mxu0 %v135
    %187 = vmatprep.subr.mxu0 0.0
    %188 = vmatpush1.msra.mxu0 %v140
    %189 = vmatprep.subr.mxu0 0.0
    %190 = vmatpush1.msra.mxu0 0.0
    %191 = vmatprep.subr.mxu0 0.0
    %192 = vmatpush1.msra.mxu0 0.0
    %193 = vmatprep.subr.mxu0 0.0
    %194 = vmatpush1.msra.mxu0 0.0
    %195 = vmatprep.subr.mxu0 0.0
    %196 = vmatpush1.msra.mxu0 0.0
    %197 = vmatprep.subr.mxu0 0.0
    %198 = vmatpush1.msra.mxu0 0.0
    %199 = vmatprep.subr.mxu0 0.0
    %200 = vmatpush1.msra.mxu0 0.0
    %201 = vmatprep.subr.mxu0 0.0
    %202 = vmatpush1.msra.mxu0 0.0
    %203 = vmatprep.subr.mxu0 0.0
    %204 = vmatpush1.msra.mxu0 0.0
    %205 = vmatprep.subr.mxu0 0.0
    %206 = vmatpush1.msra.mxu0 0.0
    %207 = vmatprep.subr.mxu0 0.0
    %208 = vmatpush1.msra.mxu0 0.0
    %209 = vmatprep.subr.mxu0 0.0
    %210 = vmatpush1.msra.mxu0 0.0
    %211 = vmatprep.subr.mxu0 0.0
    %212 = vmatpush1.msra.mxu0 0.0
    %213 = vmatprep.subr.mxu0 0.0
    %214 = vmatpush1.msra.mxu0 0.0
    %215 = vmatprep.subr.mxu0 0.0
    %216 = vmatpush1.msra.mxu0 0.0
    %217 = vmatprep.subr.mxu0 0.0
    %218 = vmatpush1.msra.mxu0 0.0
    %219 = vmatprep.subr.mxu0 0.0
    %220 = vmatpush1.msra.mxu0 0.0
    %221 = vmatprep.subr.mxu0 0.0
    %222 = vmatpush1.msra.mxu0 0.0
    %223 = vmatprep.subr.mxu0 0.0
    %224 = vmatpush1.msra.mxu0 0.0
    %225 = vmatprep.subr.mxu0 0.0
    %226 = vmatpush1.msra.mxu0 0.0
    %227 = vmatprep.subr.mxu0 0.0
    %228 = vmatpush1.msra.mxu0 0.0
    %229 = vmatprep.subr.mxu0 0.0
    %230 = vmatpush1.msra.mxu0 0.0
    %231 = vmatprep.subr.mxu0 0.0
    %232 = vmatpush1.msra.mxu0 0.0
    %233 = vmatprep.subr.mxu0 0.0
    %234 = vmatpush1.msra.mxu0 0.0
    %235 = vmatprep.subr.mxu0 0.0
    %236 = vmatpush1.msra.mxu0 0.0
    %237 = vmatprep.subr.mxu0 0.0
    %238 = vmatpush1.msra.mxu0 0.0
    %239 = vmatprep.subr.mxu0 0.0
    %240 = vmatpush1.msra.mxu0 0.0
    %241 = vmatprep.subr.mxu0 0.0
    %242 = vmatpush1.msra.mxu0 0.0
    %243 = vmatprep.subr.mxu0 0.0
    %244 = vmatpush1.msra.mxu0 0.0
    %245 = vmatprep.subr.mxu0 0.0
    %246 = vmatpush1.msra.mxu0 0.0
    %247 = vmatprep.subr.mxu0 0.0
    %248 = vmatpush1.msra.mxu0 0.0
    %249 = vmatprep.mubr.f32.mxu0 0.0
    %250 = vmatmul.mubr.f32.gmra.mrb[0].mxu0 %v174
    %v251 = vpop.f32.mrb[0].mxu0
    %v252 = vadd.f32 0.0, %v251
    %v253 = vpop.f32.mrb[0].mxu0
    %254 = vmatprep.mubr.f32.mxu0 0.0
    %255 = vmatmul.mubr.f32.gmra.mrb[0].mxu0 %v177
    %v256 = vpop.f32.mrb[0].mxu0
    %v257 = vadd.f32 0.0, %v256
    %v258 = vpop.f32.mrb[0].mxu0
    %259 = vmatprep.mubr.f32.mxu0 0.0
    %260 = vmatmul.mubr.f32.gmra.mrb[0].mxu0 %v180
    %v261 = vpop.f32.mrb[0].mxu0
    %v262 = vadd.f32 0.0, %v261
    %v263 = vpop.f32.mrb[0].mxu0
    %264 = vmatprep.mubr.f32.mxu0 0.0
    %265 = vmatmul.mubr.f32.gmra.mrb[0].mxu0 %v183
    %v266 = vpop.f32.mrb[0].mxu0
    %v267 = vadd.f32 0.0, %v266
    %v268 = vpop.f32.mrb[0].mxu0
    %269 = vdwg.mxu0
    %vm270 = vcmask 261120
    %271 = vst.msk [vmem:[#allocation5] sm:$0xff] %vm270, %v252
    %272 = vst.msk [vmem:[#allocation5 + $0x8] sm:$0xff] %vm270, %v257
    %273 = vst.msk [vmem:[#allocation5 + $0x10] sm:$0xff] %vm270, %v262
    %274 = vst.msk [vmem:[#allocation5 + $0x18] sm:$0xff] %vm270, %v267
    %275 = vmatprep.subr.mxu0 0.0
    %276 = vmatpush1.msra.mxu0 %v145
    %277 = vmatprep.subr.mxu0 0.0
    %278 = vmatpush1.msra.mxu0 %v150
    %279 = vmatprep.subr.mxu0 0.0
    %280 = vmatpush1.msra.mxu0 0.0
    %281 = vmatprep.subr.mxu0 0.0
    %282 = vmatpush1.msra.mxu0 0.0
    %283 = vmatprep.subr.mxu0 0.0
    %284 = vmatpush1.msra.mxu0 0.0
    %285 = vmatprep.subr.mxu0 0.0
    %286 = vmatpush1.msra.mxu0 0.0
    %287 = vmatprep.subr.mxu0 0.0
    %288 = vmatpush1.msra.mxu0 0.0
    %289 = vmatprep.subr.mxu0 0.0
    %290 = vmatpush1.msra.mxu0 0.0
    %291 = vmatprep.subr.mxu0 0.0
    %292 = vmatpush1.msra.mxu0 0.0
    %293 = vmatprep.subr.mxu0 0.0
    %294 = vmatpush1.msra.mxu0 0.0
    %295 = vmatprep.subr.mxu0 0.0
    %296 = vmatpush1.msra.mxu0 0.0
    %297 = vmatprep.subr.mxu0 0.0
    %298 = vmatpush1.msra.mxu0 0.0
    %299 = vmatprep.subr.mxu0 0.0
    %300 = vmatpush1.msra.mxu0 0.0
    %301 = vmatprep.subr.mxu0 0.0
    %302 = vmatpush1.msra.mxu0 0.0
    %303 = vmatprep.subr.mxu0 0.0
    %304 = vmatpush1.msra.mxu0 0.0
    %305 = vmatprep.subr.mxu0 0.0
    %306 = vmatpush1.msra.mxu0 0.0
    %307 = vmatprep.subr.mxu0 0.0
    %308 = vmatpush1.msra.mxu0 0.0
    %309 = vmatprep.subr.mxu0 0.0
    %310 = vmatpush1.msra.mxu0 0.0
    %311 = vmatprep.subr.mxu0 0.0
    %312 = vmatpush1.msra.mxu0 0.0
    %313 = vmatprep.subr.mxu0 0.0
    %314 = vmatpush1.msra.mxu0 0.0
    %315 = vmatprep.subr.mxu0 0.0
    %316 = vmatpush1.msra.mxu0 0.0
    %317 = vmatprep.subr.mxu0 0.0
    %318 = vmatpush1.msra.mxu0 0.0
    %319 = vmatprep.subr.mxu0 0.0
    %320 = vmatpush1.msra.mxu0 0.0
    %321 = vmatprep.subr.mxu0 0.0
    %322 = vmatpush1.msra.mxu0 0.0
    %323 = vmatprep.subr.mxu0 0.0
    %324 = vmatpush1.msra.mxu0 0.0
    %325 = vmatprep.subr.mxu0 0.0
    %326 = vmatpush1.msra.mxu0 0.0
    %327 = vmatprep.subr.mxu0 0.0
    %328 = vmatpush1.msra.mxu0 0.0
    %329 = vmatprep.subr.mxu0 0.0
    %330 = vmatpush1.msra.mxu0 0.0
    %331 = vmatprep.subr.mxu0 0.0
    %332 = vmatpush1.msra.mxu0 0.0
    %333 = vmatprep.subr.mxu0 0.0
    %334 = vmatpush1.msra.mxu0 0.0
    %335 = vmatprep.subr.mxu0 0.0
    %336 = vmatpush1.msra.mxu0 0.0
    %337 = vmatprep.subr.mxu0 0.0
    %338 = vmatpush1.msra.mxu0 0.0
    %339 = vmatprep.mubr.f32.mxu0 0.0
    %340 = vmatmul.mubr.f32.gmra.mrb[0].mxu0 %v174
    %v341 = vpop.f32.mrb[0].mxu0
    %v342 = vadd.f32 0.0, %v341
    %v343 = vpop.f32.mrb[0].mxu0
    %344 = vmatprep.mubr.f32.mxu0 0.0
    %345 = vmatmul.mubr.f32.gmra.mrb[0].mxu0 %v177
    %v346 = vpop.f32.mrb[0].mxu0
    %v347 = vadd.f32 0.0, %v346
    %v348 = vpop.f32.mrb[0].mxu0
    %349 = vmatprep.mubr.f32.mxu0 0.0
    %350 = vmatmul.mubr.f32.gmra.mrb[0].mxu0 %v180
    %v351 = vpop.f32.mrb[0].mxu0
    %v352 = vadd.f32 0.0, %v351
    %v353 = vpop.f32.mrb[0].mxu0
    %354 = vmatprep.mubr.f32.mxu0 0.0
    %355 = vmatmul.mubr.f32.gmra.mrb[0].mxu0 %v183
    %v356 = vpop.f32.mrb[0].mxu0
    %v357 = vadd.f32 0.0, %v356
    %v358 = vpop.f32.mrb[0].mxu0
    %359 = vdwg.mxu0
    %364 = vrot.lane.b32.xlu0 %v342, 32
    %v365 = vpop.permute.xlu0 %364
    %366 = vrot.lane.b32.xlu0 %v347, 32
    %v367 = vpop.permute.xlu0 %366
    %368 = vrot.lane.b32.xlu0 %v352, 32
    %v369 = vpop.permute.xlu0 %368
    %370 = vrot.lane.b32.xlu0 %v357, 32
    %v371 = vpop.permute.xlu0 %370
    %vm376 = vcmask 523520
    %377 = vst.msk [vmem:[#allocation5] sm:$0xff] %vm376, %v365
    %378 = vst.msk [vmem:[#allocation5 + $0x8] sm:$0xff] %vm376, %v367
    %379 = vst.msk [vmem:[#allocation5 + $0x10] sm:$0xff] %vm376, %v369
    %380 = vst.msk [vmem:[#allocation5 + $0x18] sm:$0xff] %vm376, %v371
    %381 = vmatprep.subr.mxu0 0.0
    %382 = vmatpush1.msra.mxu0 %v155
    %383 = vmatprep.subr.mxu0 0.0
    %384 = vmatpush1.msra.mxu0 %v160
    %385 = vmatprep.subr.mxu0 0.0
    %386 = vmatpush1.msra.mxu0 0.0
    %387 = vmatprep.subr.mxu0 0.0
    %388 = vmatpush1.msra.mxu0 0.0
    %389 = vmatprep.subr.mxu0 0.0
    %390 = vmatpush1.msra.mxu0 0.0
    %391 = vmatprep.subr.mxu0 0.0
    %392 = vmatpush1.msra.mxu0 0.0
    %393 = vmatprep.subr.mxu0 0.0
    %394 = vmatpush1.msra.mxu0 0.0
    %395 = vmatprep.subr.mxu0 0.0
    %396 = vmatpush1.msra.mxu0 0.0
    %397 = vmatprep.subr.mxu0 0.0
    %398 = vmatpush1.msra.mxu0 0.0
    %399 = vmatprep.subr.mxu0 0.0
    %400 = vmatpush1.msra.mxu0 0.0
    %401 = vmatprep.subr.mxu0 0.0
    %402 = vmatpush1.msra.mxu0 0.0
    %403 = vmatprep.subr.mxu0 0.0
    %404 = vmatpush1.msra.mxu0 0.0
    %405 = vmatprep.subr.mxu0 0.0
    %406 = vmatpush1.msra.mxu0 0.0
    %407 = vmatprep.subr.mxu0 0.0
    %408 = vmatpush1.msra.mxu0 0.0
    %409 = vmatprep.subr.mxu0 0.0
    %410 = vmatpush1.msra.mxu0 0.0
    %411 = vmatprep.subr.mxu0 0.0
    %412 = vmatpush1.msra.mxu0 0.0
    %413 = vmatprep.subr.mxu0 0.0
    %414 = vmatpush1.msra.mxu0 0.0
    %415 = vmatprep.subr.mxu0 0.0
    %416 = vmatpush1.msra.mxu0 0.0
    %417 = vmatprep.subr.mxu0 0.0
    %418 = vmatpush1.msra.mxu0 0.0
    %419 = vmatprep.subr.mxu0 0.0
    %420 = vmatpush1.msra.mxu0 0.0
    %421 = vmatprep.subr.mxu0 0.0
    %422 = vmatpush1.msra.mxu0 0.0
    %423 = vmatprep.subr.mxu0 0.0
    %424 = vmatpush1.msra.mxu0 0.0
    %425 = vmatprep.subr.mxu0 0.0
    %426 = vmatpush1.msra.mxu0 0.0
    %427 = vmatprep.subr.mxu0 0.0
    %428 = vmatpush1.msra.mxu0 0.0
    %429 = vmatprep.subr.mxu0 0.0
    %430 = vmatpush1.msra.mxu0 0.0
    %431 = vmatprep.subr.mxu0 0.0
    %432 = vmatpush1.msra.mxu0 0.0
    %433 = vmatprep.subr.mxu0 0.0
    %434 = vmatpush1.msra.mxu0 0.0
    %435 = vmatprep.subr.mxu0 0.0
    %436 = vmatpush1.msra.mxu0 0.0
    %437 = vmatprep.subr.mxu0 0.0
    %438 = vmatpush1.msra.mxu0 0.0
    %439 = vmatprep.subr.mxu0 0.0
    %440 = vmatpush1.msra.mxu0 0.0
    %441 = vmatprep.subr.mxu0 0.0
    %442 = vmatpush1.msra.mxu0 0.0
    %443 = vmatprep.subr.mxu0 0.0
    %444 = vmatpush1.msra.mxu0 0.0
    %445 = vmatprep.mubr.f32.mxu0 0.0
    %446 = vmatmul.mubr.f32.gmra.mrb[0].mxu0 %v174
    %v447 = vpop.f32.mrb[0].mxu0
    %v448 = vadd.f32 0.0, %v447
    %v449 = vpop.f32.mrb[0].mxu0
    %450 = vmatprep.mubr.f32.mxu0 0.0
    %451 = vmatmul.mubr.f32.gmra.mrb[0].mxu0 %v177
    %v452 = vpop.f32.mrb[0].mxu0
    %v453 = vadd.f32 0.0, %v452
    %v454 = vpop.f32.mrb[0].mxu0
    %455 = vmatprep.mubr.f32.mxu0 0.0
    %456 = vmatmul.mubr.f32.gmra.mrb[0].mxu0 %v180
    %v457 = vpop.f32.mrb[0].mxu0
    %v458 = vadd.f32 0.0, %v457
    %v459 = vpop.f32.mrb[0].mxu0
    %460 = vmatprep.mubr.f32.mxu0 0.0
    %461 = vmatmul.mubr.f32.gmra.mrb[0].mxu0 %v183
    %v462 = vpop.f32.mrb[0].mxu0
    %v463 = vadd.f32 0.0, %v462
    %v464 = vpop.f32.mrb[0].mxu0
    %465 = vdwg.mxu0
    %470 = vrot.lane.b32.xlu0 %v448, 64
    %v471 = vpop.permute.xlu0 %470
    %472 = vrot.lane.b32.xlu0 %v453, 64
    %v473 = vpop.permute.xlu0 %472
    %474 = vrot.lane.b32.xlu0 %v458, 64
    %v475 = vpop.permute.xlu0 %474
    %476 = vrot.lane.b32.xlu0 %v463, 64
    %v477 = vpop.permute.xlu0 %476
    %vm482 = vcmask 785920
    %483 = vst.msk [vmem:[#allocation5] sm:$0xff] %vm482, %v471
    %484 = vst.msk [vmem:[#allocation5 + $0x8] sm:$0xff] %vm482, %v473
    %485 = vst.msk [vmem:[#allocation5 + $0x10] sm:$0xff] %vm482, %v475
    %486 = vst.msk [vmem:[#allocation5 + $0x18] sm:$0xff] %vm482, %v477
    %487 = vmatprep.subr.mxu0 0.0
    %488 = vmatpush1.msra.mxu0 %v165
    %489 = vmatprep.subr.mxu0 0.0
    %490 = vmatpush1.msra.mxu0 %v170
    %491 = vmatprep.subr.mxu0 0.0
    %492 = vmatpush1.msra.mxu0 0.0
    %493 = vmatprep.subr.mxu0 0.0
    %494 = vmatpush1.msra.mxu0 0.0
    %495 = vmatprep.subr.mxu0 0.0
    %496 = vmatpush1.msra.mxu0 0.0
    %497 = vmatprep.subr.mxu0 0.0
    %498 = vmatpush1.msra.mxu0 0.0
    %499 = vmatprep.subr.mxu0 0.0
    %500 = vmatpush1.msra.mxu0 0.0
    %501 = vmatprep.subr.mxu0 0.0
    %502 = vmatpush1.msra.mxu0 0.0
    %503 = vmatprep.subr.mxu0 0.0
    %504 = vmatpush1.msra.mxu0 0.0
    %505 = vmatprep.subr.mxu0 0.0
    %506 = vmatpush1.msra.mxu0 0.0
    %507 = vmatprep.subr.mxu0 0.0
    %508 = vmatpush1.msra.mxu0 0.0
    %509 = vmatprep.subr.mxu0 0.0
    %510 = vmatpush1.msra.mxu0 0.0
    %511 = vmatprep.subr.mxu0 0.0
    %512 = vmatpush1.msra.mxu0 0.0
    %513 = vmatprep.subr.mxu0 0.0
    %514 = vmatpush1.msra.mxu0 0.0
    %515 = vmatprep.subr.mxu0 0.0
    %516 = vmatpush1.msra.mxu0 0.0
    %517 = vmatprep.subr.mxu0 0.0
    %518 = vmatpush1.msra.mxu0 0.0
    %519 = vmatprep.subr.mxu0 0.0
    %520 = vmatpush1.msra.mxu0 0.0
    %521 = vmatprep.subr.mxu0 0.0
    %522 = vmatpush1.msra.mxu0 0.0
    %523 = vmatprep.subr.mxu0 0.0
    %524 = vmatpush1.msra.mxu0 0.0
    %525 = vmatprep.subr.mxu0 0.0
    %526 = vmatpush1.msra.mxu0 0.0
    %527 = vmatprep.subr.mxu0 0.0
    %528 = vmatpush1.msra.mxu0 0.0
    %529 = vmatprep.subr.mxu0 0.0
    %530 = vmatpush1.msra.mxu0 0.0
    %531 = vmatprep.subr.mxu0 0.0
    %532 = vmatpush1.msra.mxu0 0.0
    %533 = vmatprep.subr.mxu0 0.0
    %534 = vmatpush1.msra.mxu0 0.0
    %535 = vmatprep.subr.mxu0 0.0
    %536 = vmatpush1.msra.mxu0 0.0
    %537 = vmatprep.subr.mxu0 0.0
    %538 = vmatpush1.msra.mxu0 0.0
    %539 = vmatprep.subr.mxu0 0.0
    %540 = vmatpush1.msra.mxu0 0.0
    %541 = vmatprep.subr.mxu0 0.0
    %542 = vmatpush1.msra.mxu0 0.0
    %543 = vmatprep.subr.mxu0 0.0
    %544 = vmatpush1.msra.mxu0 0.0
    %545 = vmatprep.subr.mxu0 0.0
    %546 = vmatpush1.msra.mxu0 0.0
    %547 = vmatprep.subr.mxu0 0.0
    %548 = vmatpush1.msra.mxu0 0.0
    %549 = vmatprep.subr.mxu0 0.0
    %550 = vmatpush1.msra.mxu0 0.0
    %551 = vmatprep.mubr.f32.mxu0 0.0
    %552 = vmatmul.mubr.f32.gmra.mrb[0].mxu0 %v174
    %v553 = vpop.f32.mrb[0].mxu0
    %v554 = vadd.f32 0.0, %v553
    %v555 = vpop.f32.mrb[0].mxu0
    %556 = vmatprep.mubr.f32.mxu0 0.0
    %557 = vmatmul.mubr.f32.gmra.mrb[0].mxu0 %v177
    %v558 = vpop.f32.mrb[0].mxu0
    %v559 = vadd.f32 0.0, %v558
    %v560 = vpop.f32.mrb[0].mxu0
    %561 = vmatprep.mubr.f32.mxu0 0.0
    %562 = vmatmul.mubr.f32.gmra.mrb[0].mxu0 %v180
    %v563 = vpop.f32.mrb[0].mxu0
    %v564 = vadd.f32 0.0, %v563
    %v565 = vpop.f32.mrb[0].mxu0
    %566 = vmatprep.mubr.f32.mxu0 0.0
    %567 = vmatmul.mubr.f32.gmra.mrb[0].mxu0 %v183
    %v568 = vpop.f32.mrb[0].mxu0
    %v569 = vadd.f32 0.0, %v568
    %v570 = vpop.f32.mrb[0].mxu0
    %571 = vdwg.mxu0
    %576 = vrot.lane.b32.xlu0 %v554, 96
    %v577 = vpop.permute.xlu0 %576
    %578 = vrot.lane.b32.xlu0 %v559, 96
    %v579 = vpop.permute.xlu0 %578
    %580 = vrot.lane.b32.xlu0 %v564, 96
    %v581 = vpop.permute.xlu0 %580
    %582 = vrot.lane.b32.xlu0 %v569, 96
    %v583 = vpop.permute.xlu0 %582
    %vm588 = vcmask 1048320
    %589 = vst.msk [vmem:[#allocation5] sm:$0xff] %vm588, %v577
    %590 = vst.msk [vmem:[#allocation5 + $0x8] sm:$0xff] %vm588, %v579
    %591 = vst.msk [vmem:[#allocation5 + $0x10] sm:$0xff] %vm588, %v581
    %592 = vst.msk [vmem:[#allocation5 + $0x18] sm:$0xff] %vm588, %v583
    // Predicated region
    $region18: #{tpu_custom_call.1} parent=1 // pred_check
      _
    $region19: #{tpu_custom_call.1} parent=1 // pred_check_branch
      %594 = sbr.rel (0) target = $region21
    $region20: #{tpu_custom_call.1} parent=1 // pred_region
      %s596 = ssub.s32 512, 512
      %597 = vsyncadd [#allocation4], %s596
      %s598 = sshll.u32 [#allocation5], 4
      %s599 = int_to_ptr.vmem [resolvable:$true] %s598
      %604 = dma.vmem_to_hbm [thread:$0]  %s599, 512, %s3, [#allocation4], 128, 128, 8
    $region21: #{tpu_custom_call.1} parent=1 // pred_fallthru
      _
    // Predicated region
    $region22: #{tpu_custom_call.1} parent=1 // pred_check
      _
    $region23: #{tpu_custom_call.1} parent=1 // pred_check_branch
      %606 = sbr.rel (0) target = $region25
    $region24: #{tpu_custom_call.1} parent=1 // pred_region
      %607 = dma.done [#allocation4], 512
    $region25: #{tpu_custom_call.1} parent=1 // pred_fallthru
      _
    %608 = vsyncpa [#allocation3], 1
    %609 = vsyncpa [#allocation4], 1

</llo_original>
